<compile_context>
chip_gen: v7x
topology: tpu7x:2x2x1
jax: 0.10.0
libtpu: 0.0.40
codegen_flags: <defaults>
</compile_context>

<pallas_src>
import functools

import jax
import jax.numpy as jnp
from jax.experimental import pallas as pl
from jax.experimental.pallas import tpu as pltpu

LOG_SIG_MAX = 2.0
LOG_SIG_MIN = -20.0


def _round_up(x, m):
    return ((x + m - 1) // m) * m


def _pick_batch_block(b_pad, batch_block):
    """Largest multiple-of-8 divisor of b_pad that is <= batch_block and leaves
    at least min(4, b_pad // 8) grid steps (pipelining + 2-TC sharding)."""
    target_steps = min(4, max(1, b_pad // 8))
    cap = max(8, min(batch_block, (b_pad // target_steps) // 8 * 8))
    blk = cap
    while blk > 8 and b_pad % blk != 0:
        blk -= 8
    return blk if b_pad % blk == 0 else 8


def policy_kernel(obs_ref, eps_ref,
                  w0_ref, b0_ref,
                  w1_ref, b1_ref,
                  w2_ref, b2_ref,
                  out_ref, *, action_dim):
    A = action_dim
    mxu_dtype = w0_ref.dtype  # f32, or bf16 for the MXU-native weight path

    # --- obs_processor: Linear + ReLU (epilogue in f32) ---
    h = jnp.dot(obs_ref[...].astype(mxu_dtype), w0_ref[...],
                preferred_element_type=jnp.float32)
    h = jnp.maximum(h + b0_ref[...], 0.0)

    # --- Mlp hidden layer: Linear + ReLU ---
    h = jnp.dot(h.astype(mxu_dtype), w1_ref[...],
                preferred_element_type=jnp.float32)
    h = jnp.maximum(h + b1_ref[...], 0.0)

    # --- Mlp output layer: single fused (hidden, 2A) matmul, split heads ---
    y = jnp.dot(h.astype(mxu_dtype), w2_ref[...],
                preferred_element_type=jnp.float32) + b2_ref[...]
    mean = y[:, :A]
    log_std = jnp.clip(y[:, A:], LOG_SIG_MIN, LOG_SIG_MAX)
    std = jnp.exp(log_std)

    # --- TanhNormal.rsample(): tanh(mean + std * eps) ---
    action = jnp.tanh(mean + std * eps_ref[...])

    # One full-tile store of the fused slab [action | mean | log_std | std].
    out_ref[...] = jnp.concatenate([action, mean, log_std, std], axis=1)


def _policy_pallas_call(obs, eps, params, *, blk, action_dim,
                        single_buffer_weights):
    B_pad, obs_dim = obs.shape
    A = action_dim
    proc_out = params["w0"].shape[1]
    hidden = params["w1"].shape[1]
    out_w = 4 * A
    w_itemsize = jnp.dtype(params["w0"].dtype).itemsize

    batched = lambda i: (i, 0)    # obs / eps / output move with the grid
    resident_kwargs = {}
    if single_buffer_weights:
        # Resident blocks never change -> single pipeline buffer is enough.
        resident_kwargs["pipeline_mode"] = pl.Buffered(1)

    def resident(shape):
        return pl.BlockSpec(shape, lambda i: (0, 0), **resident_kwargs)

    # VMEM budget: double-buffered I/O blocks + (conservatively double-
    # buffered) resident weights + live activations + Mosaic scratch headroom.
    # Capped at 48 MiB so it fits comfortably inside a v7x TC (64 MiB).
    weight_bytes = (w_itemsize * (obs_dim * proc_out + proc_out * hidden
                                  + hidden * 2 * A)
                    + 4 * (proc_out + hidden + 2 * A))
    in_block_bytes = 4 * blk * (obs_dim + A)
    out_block_bytes = 4 * blk * out_w
    act_block_bytes = 4 * blk * (proc_out + hidden + 2 * A + out_w)
    vmem_limit = int(min(max(2 * (in_block_bytes + out_block_bytes)
                             + 2 * weight_bytes
                             + act_block_bytes
                             + (4 << 20),
                             16 << 20),
                         48 << 20))

    cost = pl.CostEstimate(
        flops=2 * B_pad * (obs_dim * proc_out + proc_out * hidden
                           + hidden * 2 * A),
        transcendentals=2 * B_pad * A,  # exp + tanh
        bytes_accessed=4 * B_pad * (obs_dim + A + out_w) + weight_bytes,
    )

    return pl.pallas_call(
        functools.partial(policy_kernel, action_dim=A),
        out_shape=jax.ShapeDtypeStruct((B_pad, out_w), jnp.float32),
        grid_spec=pltpu.PrefetchScalarGridSpec(
            num_scalar_prefetch=0,
            grid=(B_pad // blk,),
            in_specs=[
                pl.BlockSpec((blk, obs_dim), batched),      # obs
                pl.BlockSpec((blk, A), batched),            # eps
                resident((obs_dim, proc_out)),              # w0
                resident((1, proc_out)),                    # b0
                resident((proc_out, hidden)),               # w1
                resident((1, hidden)),                      # b1
                resident((hidden, 2 * A)),                  # w2 (fused head)
                resident((1, 2 * A)),                       # b2
            ],
            out_specs=pl.BlockSpec((blk, out_w), batched),
        ),
        compiler_params=pltpu.CompilerParams(
            dimension_semantics=("parallel",),   # 2-TC sharding on v7x
            vmem_limit_bytes=vmem_limit,
        ),
        cost_estimate=cost,
    )(obs, eps,
      params["w0"], params["b0"],
      params["w1"], params["b1"],
      params["w2"], params["b2"])


def tanh_gaussian_policy_forward(obs, eps, params, *, batch_block=4096):
    """obs: (B, obs_dim) f32, eps: (B, action_dim) f32 standard-normal noise.

    Returns the same 8-tuple as the PyTorch module's default code path:
    (action, mean, log_std, None, None, std, None, None).
    """
    B, _ = obs.shape
    A = eps.shape[1]

    # Pad only to a multiple of 8 (sublane alignment, at most 7 extra rows);
    # the batch block is then chosen as an exact divisor of B_pad, so no
    # whole-array block padding is ever needed.
    B_pad = _round_up(B, 8)
    if B_pad != B:
        # TODO(synk): a ragged in-kernel tail block would avoid even this
        # small (<= 7 row) pad copy.
        pad = B_pad - B
        obs = jnp.pad(obs, ((0, pad), (0, 0)))
        eps = jnp.pad(eps, ((0, pad), (0, 0)))

    blk = _pick_batch_block(B_pad, batch_block)

    try:
        fused = _policy_pallas_call(obs, eps, params, blk=blk, action_dim=A,
                                    single_buffer_weights=True)
    except Exception:
        # pipeline_mode=pl.Buffered(1) not supported on this jax version:
        # fall back to default double-buffered resident weights.
        fused = _policy_pallas_call(obs, eps, params, blk=blk, action_dim=A,
                                    single_buffer_weights=False)

    fused = fused[:B]
    action = fused[:, 0 * A:1 * A]
    mean = fused[:, 1 * A:2 * A]
    log_std = fused[:, 2 * A:3 * A]
    std = fused[:, 3 * A:4 * A]
    # Same 8-tuple as the PyTorch module (log_prob, entropy,
    # mean_action_log_prob, pre_tanh_value are None on this code path).
    return action, mean, log_std, None, None, std, None, None


def make_params(key, obs_dim, proc_out_dim, hidden_size, action_dim,
                weight_dtype=jnp.float32):
    """Deterministic synthetic parameters (fanin-style scaling).

    Weights may be bf16 (v6e/v7x MXU-native); biases stay f32 so all
    elementwise math stays on the f32 VPU/EUP path.
    """
    ks = jax.random.split(key, 4)

    def lin(k, fan_in, fan_out):
        return jax.random.normal(k, (fan_in, fan_out), jnp.float32) / jnp.sqrt(fan_in)

    w0 = lin(ks[0], obs_dim, proc_out_dim).astype(weight_dtype)
    b0 = jnp.zeros((1, proc_out_dim), jnp.float32)
    w1 = lin(ks[1], proc_out_dim, hidden_size).astype(weight_dtype)
    b1 = jnp.zeros((1, hidden_size), jnp.float32)
    # Last layer: output size 2*action_dim; kept fused (split happens in-kernel).
    w2 = (lin(ks[2], hidden_size, 2 * action_dim) * 1e-1).astype(weight_dtype)
    b2 = jax.random.normal(ks[3], (1, 2 * action_dim), jnp.float32) * 1e-2
    return dict(w0=w0, b0=b0, w1=w1, b1=b1, w2=w2, b2=b2)


def reference_forward(obs, eps, p, action_dim):
    mxu_dtype = p["w0"].dtype

    def dot(x, w):
        return jnp.dot(x.astype(mxu_dtype), w, preferred_element_type=jnp.float32)

    h = jnp.maximum(dot(obs, p["w0"]) + p["b0"], 0.0)
    h = jnp.maximum(dot(h, p["w1"]) + p["b1"], 0.0)
    y = dot(h, p["w2"]) + p["b2"]
    mean = y[:, :action_dim]
    log_std = jnp.clip(y[:, action_dim:], LOG_SIG_MIN, LOG_SIG_MAX)
    std = jnp.exp(log_std)
    action = jnp.tanh(mean + std * eps)
    return action, mean, log_std, std


def _check(B, OBS_DIM, PROC_OUT, HIDDEN, ACTION_DIM, seed,
           weight_dtype=jnp.float32, atol=1e-5):
    key = jax.random.PRNGKey(seed)
    k_obs, k_eps, k_par = jax.random.split(key, 3)

    obs = jax.random.normal(k_obs, (B, OBS_DIM), jnp.float32)
    eps = jax.random.normal(k_eps, (B, ACTION_DIM), jnp.float32)  # rsample noise
    params = make_params(k_par, OBS_DIM, PROC_OUT, HIDDEN, ACTION_DIM,
                         weight_dtype=weight_dtype)

    out = tanh_gaussian_policy_forward(obs, eps, params)
    action, mean, log_std, log_prob, entropy, std, malp, pre_tanh = out
    jax.block_until_ready(action)

    ra, rm, rls, rs = reference_forward(obs, eps, params, ACTION_DIM)
    assert jnp.allclose(action, ra, atol=atol), "action mismatch"
    assert jnp.allclose(mean, rm, atol=atol), "mean mismatch"
    assert jnp.allclose(log_std, rls, atol=atol), "log_std mismatch"
    assert jnp.allclose(std, rs, atol=atol), "std mismatch"
    assert action.shape == (B, ACTION_DIM) and std.dtype == jnp.float32
    assert log_prob is None and entropy is None and malp is None and pre_tanh is None


if __name__ == "__main__":
    # Small shapes matching the module (one hidden layer, action_dim=4).
    _check(B=8, OBS_DIM=16, PROC_OUT=32, HIDDEN=32, ACTION_DIM=4, seed=0)    # grid=(1,)
    # Batch not a multiple of 8: sublane pad + 2-step grid (pipelined).
    _check(B=13, OBS_DIM=16, PROC_OUT=32, HIDDEN=32, ACTION_DIM=4, seed=1)   # grid=(2,)
    # 4-step grid (full pipelining / megacore sharding path).
    _check(B=64, OBS_DIM=16, PROC_OUT=32, HIDDEN=32, ACTION_DIM=4, seed=2)   # grid=(4,)
    # bf16-weight path (v6e/v7x MXU-native); epilogue stays f32.
    _check(B=64, OBS_DIM=16, PROC_OUT=32, HIDDEN=64, ACTION_DIM=4, seed=3,
           weight_dtype=jnp.bfloat16, atol=2e-2)
    print("KERNEL_OK")
</pallas_src>

<mosaic_0001>
module attributes {stable_mosaic.version = 11 : i64} {
  func.func @policy_kernel(%arg0: i32, %arg1: memref<8x16xf32, #tpu.memory_space<vmem>>, %arg2: memref<8x4xf32, #tpu.memory_space<vmem>>, %arg3: memref<16x32xf32, #tpu.memory_space<vmem>>, %arg4: memref<1x32xf32, #tpu.memory_space<vmem>>, %arg5: memref<32x32xf32, #tpu.memory_space<vmem>>, %arg6: memref<1x32xf32, #tpu.memory_space<vmem>>, %arg7: memref<32x8xf32, #tpu.memory_space<vmem>>, %arg8: memref<1x8xf32, #tpu.memory_space<vmem>>, %arg9: memref<8x16xf32, #tpu.memory_space<vmem>>) attributes {dimension_semantics = [#tpu.dimension_semantics<parallel>], iteration_bounds = array<i64: 1>, scalar_prefetch = 0 : i64, scratch_operands = 0 : i64, tpu.core_type = #tpu.core_type<tc>, window_params = [{transform_indices = @transform_0, window_bounds = array<i64: 8, 16>}, {transform_indices = @transform_1, window_bounds = array<i64: 8, 4>}, {pipeline_mode = #tpu.pipeline_mode<synchronous>, transform_indices = @transform_2, window_bounds = array<i64: 16, 32>}, {pipeline_mode = #tpu.pipeline_mode<synchronous>, transform_indices = @transform_3, window_bounds = array<i64: 1, 32>}, {pipeline_mode = #tpu.pipeline_mode<synchronous>, transform_indices = @transform_4, window_bounds = array<i64: 32, 32>}, {pipeline_mode = #tpu.pipeline_mode<synchronous>, transform_indices = @transform_5, window_bounds = array<i64: 1, 32>}, {pipeline_mode = #tpu.pipeline_mode<synchronous>, transform_indices = @transform_6, window_bounds = array<i64: 32, 8>}, {pipeline_mode = #tpu.pipeline_mode<synchronous>, transform_indices = @transform_7, window_bounds = array<i64: 1, 8>}, {transform_indices = @transform_8, window_bounds = array<i64: 8, 16>}]} {
    %c0 = arith.constant 0 : index
    %c0_0 = arith.constant 0 : index
    %0 = vector.load %arg1[%c0, %c0_0] : memref<8x16xf32, #tpu.memory_space<vmem>>, vector<8x16xf32>
    %c0_1 = arith.constant 0 : index
    %c0_2 = arith.constant 0 : index
    %1 = vector.load %arg3[%c0_1, %c0_2] : memref<16x32xf32, #tpu.memory_space<vmem>>, vector<16x32xf32>
    %cst = arith.constant dense<0.000000e+00> : vector<8x32xf32>
    %2 = tpu.matmul %0, %1, %cst {dimension_numbers = #tpu.dot_dimension_numbers<[1], [0], [0], [1], [0, 0, 1, 1], [], []>} : vector<8x16xf32>, vector<16x32xf32>, vector<8x32xf32> -> vector<8x32xf32>
    %c0_3 = arith.constant 0 : index
    %c0_4 = arith.constant 0 : index
    %3 = vector.load %arg4[%c0_3, %c0_4] : memref<1x32xf32, #tpu.memory_space<vmem>>, vector<1x32xf32>
    %4 = vector.broadcast %3 : vector<1x32xf32> to vector<8x32xf32>
    %5 = arith.addf %2, %4 : vector<8x32xf32>
    %cst_5 = arith.constant 0.000000e+00 : f32
    %6 = vector.broadcast %cst_5 : f32 to vector<8x32xf32>
    %7 = arith.maximumf %5, %6 : vector<8x32xf32>
    %c0_6 = arith.constant 0 : index
    %c0_7 = arith.constant 0 : index
    %8 = vector.load %arg5[%c0_6, %c0_7] : memref<32x32xf32, #tpu.memory_space<vmem>>, vector<32x32xf32>
    %cst_8 = arith.constant dense<0.000000e+00> : vector<8x32xf32>
    %9 = tpu.matmul %7, %8, %cst_8 {dimension_numbers = #tpu.dot_dimension_numbers<[1], [0], [0], [1], [0, 0, 1, 1], [], []>} : vector<8x32xf32>, vector<32x32xf32>, vector<8x32xf32> -> vector<8x32xf32>
    %c0_9 = arith.constant 0 : index
    %c0_10 = arith.constant 0 : index
    %10 = vector.load %arg6[%c0_9, %c0_10] : memref<1x32xf32, #tpu.memory_space<vmem>>, vector<1x32xf32>
    %11 = vector.broadcast %10 : vector<1x32xf32> to vector<8x32xf32>
    %12 = arith.addf %9, %11 : vector<8x32xf32>
    %cst_11 = arith.constant 0.000000e+00 : f32
    %13 = vector.broadcast %cst_11 : f32 to vector<8x32xf32>
    %14 = arith.maximumf %12, %13 : vector<8x32xf32>
    %c0_12 = arith.constant 0 : index
    %c0_13 = arith.constant 0 : index
    %15 = vector.load %arg7[%c0_12, %c0_13] : memref<32x8xf32, #tpu.memory_space<vmem>>, vector<32x8xf32>
    %cst_14 = arith.constant dense<0.000000e+00> : vector<8x8xf32>
    %16 = tpu.matmul %14, %15, %cst_14 {dimension_numbers = #tpu.dot_dimension_numbers<[1], [0], [0], [1], [0, 0, 1, 1], [], []>} : vector<8x32xf32>, vector<32x8xf32>, vector<8x8xf32> -> vector<8x8xf32>
    %c0_15 = arith.constant 0 : index
    %c0_16 = arith.constant 0 : index
    %17 = vector.load %arg8[%c0_15, %c0_16] : memref<1x8xf32, #tpu.memory_space<vmem>>, vector<1x8xf32>
    %18 = vector.broadcast %17 : vector<1x8xf32> to vector<8x8xf32>
    %19 = arith.addf %16, %18 : vector<8x8xf32>
    %20 = vector.extract_strided_slice %19 {offsets = [0, 0], sizes = [8, 4], strides = [1, 1]} : vector<8x8xf32> to vector<8x4xf32>
    %21 = vector.extract_strided_slice %19 {offsets = [0, 4], sizes = [8, 4], strides = [1, 1]} : vector<8x8xf32> to vector<8x4xf32>
    %cst_17 = arith.constant -2.000000e+01 : f32
    %cst_18 = arith.constant 2.000000e+00 : f32
    %22 = vector.broadcast %cst_17 : f32 to vector<8x4xf32>
    %23 = arith.maximumf %22, %21 : vector<8x4xf32>
    %24 = vector.broadcast %cst_18 : f32 to vector<8x4xf32>
    %25 = arith.minimumf %24, %23 : vector<8x4xf32>
    %26 = math.exp %25 : vector<8x4xf32>
    %c0_19 = arith.constant 0 : index
    %c0_20 = arith.constant 0 : index
    %27 = vector.load %arg2[%c0_19, %c0_20] : memref<8x4xf32, #tpu.memory_space<vmem>>, vector<8x4xf32>
    %28 = arith.mulf %26, %27 : vector<8x4xf32>
    %29 = arith.addf %20, %28 : vector<8x4xf32>
    %30 = math.tanh %29 : vector<8x4xf32>
    %31 = tpu.concatenate %30, %20, %25, %26 in 1 : vector<8x4xf32>, vector<8x4xf32>, vector<8x4xf32>, vector<8x4xf32> -> vector<8x16xf32>
    %c0_21 = arith.constant 0 : index
    %c0_22 = arith.constant 0 : index
    %32 = vector.load %arg9[%c0_21, %c0_22] : memref<8x16xf32, #tpu.memory_space<vmem>>, vector<8x16xf32>
    tpu.vector_store %arg9[%c0_21, %c0_22], %31 {strides = array<i32>} : memref<8x16xf32, #tpu.memory_space<vmem>>, vector<8x16xf32>,
    return
  }
  func.func @transform_0(%arg0: i32) -> (i32, i32) {
    %c0_i32 = arith.constant 0 : i32
    %c0_i32_0 = arith.constant 0 : i32
    return %arg0, %c0_i32 : i32, i32
  }
  func.func @transform_1(%arg0: i32) -> (i32, i32) {
    %c0_i32 = arith.constant 0 : i32
    %c0_i32_0 = arith.constant 0 : i32
    return %arg0, %c0_i32 : i32, i32
  }
  func.func @transform_2(%arg0: i32) -> (i32, i32) {
    %c0_i32 = arith.constant 0 : i32
    %c0_i32_0 = arith.constant 0 : i32
    %c0_i32_1 = arith.constant 0 : i32
    return %c0_i32, %c0_i32_0 : i32, i32
  }
  func.func @transform_3(%arg0: i32) -> (i32, i32) {
    %c0_i32 = arith.constant 0 : i32
    %c0_i32_0 = arith.constant 0 : i32
    %c0_i32_1 = arith.constant 0 : i32
    return %c0_i32, %c0_i32_0 : i32, i32
  }
  func.func @transform_4(%arg0: i32) -> (i32, i32) {
    %c0_i32 = arith.constant 0 : i32
    %c0_i32_0 = arith.constant 0 : i32
    %c0_i32_1 = arith.constant 0 : i32
    return %c0_i32, %c0_i32_0 : i32, i32
  }
  func.func @transform_5(%arg0: i32) -> (i32, i32) {
    %c0_i32 = arith.constant 0 : i32
    %c0_i32_0 = arith.constant 0 : i32
    %c0_i32_1 = arith.constant 0 : i32
    return %c0_i32, %c0_i32_0 : i32, i32
  }
  func.func @transform_6(%arg0: i32) -> (i32, i32) {
    %c0_i32 = arith.constant 0 : i32
    %c0_i32_0 = arith.constant 0 : i32
    %c0_i32_1 = arith.constant 0 : i32
    return %c0_i32, %c0_i32_0 : i32, i32
  }
  func.func @transform_7(%arg0: i32) -> (i32, i32) {
    %c0_i32 = arith.constant 0 : i32
    %c0_i32_0 = arith.constant 0 : i32
    %c0_i32_1 = arith.constant 0 : i32
    return %c0_i32, %c0_i32_0 : i32, i32
  }
  func.func @transform_8(%arg0: i32) -> (i32, i32) {
    %c0_i32 = arith.constant 0 : i32
    %c0_i32_0 = arith.constant 0 : i32
    return %arg0, %c0_i32 : i32, i32
  }
}

module attributes {stable_mosaic.version = 11 : i64} {
  func.func @policy_kernel(%arg0: i32, %arg1: memref<8x16xf32, #tpu.memory_space<vmem>>, %arg2: memref<8x4xf32, #tpu.memory_space<vmem>>, %arg3: memref<16x32xf32, #tpu.memory_space<vmem>>, %arg4: memref<1x32xf32, #tpu.memory_space<vmem>>, %arg5: memref<32x32xf32, #tpu.memory_space<vmem>>, %arg6: memref<1x32xf32, #tpu.memory_space<vmem>>, %arg7: memref<32x8xf32, #tpu.memory_space<vmem>>, %arg8: memref<1x8xf32, #tpu.memory_space<vmem>>, %arg9: memref<8x16xf32, #tpu.memory_space<vmem>>) attributes {dimension_semantics = [#tpu.dimension_semantics<parallel>], iteration_bounds = array<i64: 1>, scalar_prefetch = 0 : i64, scratch_operands = 0 : i64, tpu.core_type = #tpu.core_type<tc>, window_params = [{transform_indices = @transform_0, window_bounds = array<i64: 8, 16>}, {transform_indices = @transform_1, window_bounds = array<i64: 8, 4>}, {pipeline_mode = #tpu.pipeline_mode<synchronous>, transform_indices = @transform_2, window_bounds = array<i64: 16, 32>}, {pipeline_mode = #tpu.pipeline_mode<synchronous>, transform_indices = @transform_3, window_bounds = array<i64: 1, 32>}, {pipeline_mode = #tpu.pipeline_mode<synchronous>, transform_indices = @transform_4, window_bounds = array<i64: 32, 32>}, {pipeline_mode = #tpu.pipeline_mode<synchronous>, transform_indices = @transform_5, window_bounds = array<i64: 1, 32>}, {pipeline_mode = #tpu.pipeline_mode<synchronous>, transform_indices = @transform_6, window_bounds = array<i64: 32, 8>}, {pipeline_mode = #tpu.pipeline_mode<synchronous>, transform_indices = @transform_7, window_bounds = array<i64: 1, 8>}, {transform_indices = @transform_8, window_bounds = array<i64: 8, 16>}]} {
    %c0 = arith.constant 0 : index
    %c0_0 = arith.constant 0 : index
    %0 = vector.load %arg1[%c0, %c0_0] : memref<8x16xf32, #tpu.memory_space<vmem>>, vector<8x16xf32>
    %c0_1 = arith.constant 0 : index
    %c0_2 = arith.constant 0 : index
    %1 = vector.load %arg3[%c0_1, %c0_2] : memref<16x32xf32, #tpu.memory_space<vmem>>, vector<16x32xf32>
    %cst = arith.constant dense<0.000000e+00> : vector<8x32xf32>
    %2 = tpu.matmul %0, %1, %cst {dimension_numbers = #tpu.dot_dimension_numbers<[1], [0], [0], [1], [0, 0, 1, 1], [], []>} : vector<8x16xf32>, vector<16x32xf32>, vector<8x32xf32> -> vector<8x32xf32>
    %c0_3 = arith.constant 0 : index
    %c0_4 = arith.constant 0 : index
    %3 = vector.load %arg4[%c0_3, %c0_4] : memref<1x32xf32, #tpu.memory_space<vmem>>, vector<1x32xf32>
    %4 = vector.broadcast %3 : vector<1x32xf32> to vector<8x32xf32>
    %5 = arith.addf %2, %4 : vector<8x32xf32>
    %cst_5 = arith.constant 0.000000e+00 : f32
    %6 = vector.broadcast %cst_5 : f32 to vector<8x32xf32>
    %7 = arith.maximumf %5, %6 : vector<8x32xf32>
    %c0_6 = arith.constant 0 : index
    %c0_7 = arith.constant 0 : index
    %8 = vector.load %arg5[%c0_6, %c0_7] : memref<32x32xf32, #tpu.memory_space<vmem>>, vector<32x32xf32>
    %cst_8 = arith.constant dense<0.000000e+00> : vector<8x32xf32>
    %9 = tpu.matmul %7, %8, %cst_8 {dimension_numbers = #tpu.dot_dimension_numbers<[1], [0], [0], [1], [0, 0, 1, 1], [], []>} : vector<8x32xf32>, vector<32x32xf32>, vector<8x32xf32> -> vector<8x32xf32>
    %c0_9 = arith.constant 0 : index
    %c0_10 = arith.constant 0 : index
    %10 = vector.load %arg6[%c0_9, %c0_10] : memref<1x32xf32, #tpu.memory_space<vmem>>, vector<1x32xf32>
    %11 = vector.broadcast %10 : vector<1x32xf32> to vector<8x32xf32>
    %12 = arith.addf %9, %11 : vector<8x32xf32>
    %cst_11 = arith.constant 0.000000e+00 : f32
    %13 = vector.broadcast %cst_11 : f32 to vector<8x32xf32>
    %14 = arith.maximumf %12, %13 : vector<8x32xf32>
    %c0_12 = arith.constant 0 : index
    %c0_13 = arith.constant 0 : index
    %15 = vector.load %arg7[%c0_12, %c0_13] : memref<32x8xf32, #tpu.memory_space<vmem>>, vector<32x8xf32>
    %cst_14 = arith.constant dense<0.000000e+00> : vector<8x8xf32>
    %16 = tpu.matmul %14, %15, %cst_14 {dimension_numbers = #tpu.dot_dimension_numbers<[1], [0], [0], [1], [0, 0, 1, 1], [], []>} : vector<8x32xf32>, vector<32x8xf32>, vector<8x8xf32> -> vector<8x8xf32>
    %c0_15 = arith.constant 0 : index
    %c0_16 = arith.constant 0 : index
    %17 = vector.load %arg8[%c0_15, %c0_16] : memref<1x8xf32, #tpu.memory_space<vmem>>, vector<1x8xf32>
    %18 = vector.broadcast %17 : vector<1x8xf32> to vector<8x8xf32>
    %19 = arith.addf %16, %18 : vector<8x8xf32>
    %20 = vector.extract_strided_slice %19 {offsets = [0, 0], sizes = [8, 4], strides = [1, 1]} : vector<8x8xf32> to vector<8x4xf32>
    %21 = vector.extract_strided_slice %19 {offsets = [0, 4], sizes = [8, 4], strides = [1, 1]} : vector<8x8xf32> to vector<8x4xf32>
    %cst_17 = arith.constant -2.000000e+01 : f32
    %cst_18 = arith.constant 2.000000e+00 : f32
    %22 = vector.broadcast %cst_17 : f32 to vector<8x4xf32>
    %23 = arith.maximumf %22, %21 : vector<8x4xf32>
    %24 = vector.broadcast %cst_18 : f32 to vector<8x4xf32>
    %25 = arith.minimumf %24, %23 : vector<8x4xf32>
    %26 = math.exp %25 : vector<8x4xf32>
    %c0_19 = arith.constant 0 : index
    %c0_20 = arith.constant 0 : index
    %27 = vector.load %arg2[%c0_19, %c0_20] : memref<8x4xf32, #tpu.memory_space<vmem>>, vector<8x4xf32>
    %28 = arith.mulf %26, %27 : vector<8x4xf32>
    %29 = arith.addf %20, %28 : vector<8x4xf32>
    %30 = math.tanh %29 : vector<8x4xf32>
    %31 = tpu.concatenate %30, %20, %25, %26 in 1 : vector<8x4xf32>, vector<8x4xf32>, vector<8x4xf32>, vector<8x4xf32> -> vector<8x16xf32>
    %c0_21 = arith.constant 0 : index
    %c0_22 = arith.constant 0 : index
    %32 = vector.load %arg9[%c0_21, %c0_22] : memref<8x16xf32, #tpu.memory_space<vmem>>, vector<8x16xf32>
    tpu.vector_store %arg9[%c0_21, %c0_22], %31 {strides = array<i32>} : memref<8x16xf32, #tpu.memory_space<vmem>>, vector<8x16xf32>,
    return
  }
  func.func @transform_0(%arg0: i32) -> (i32, i32) {
    %c0_i32 = arith.constant 0 : i32
    %c0_i32_0 = arith.constant 0 : i32
    return %arg0, %c0_i32 : i32, i32
  }
  func.func @transform_1(%arg0: i32) -> (i32, i32) {
    %c0_i32 = arith.constant 0 : i32
    %c0_i32_0 = arith.constant 0 : i32
    return %arg0, %c0_i32 : i32, i32
  }
  func.func @transform_2(%arg0: i32) -> (i32, i32) {
    %c0_i32 = arith.constant 0 : i32
    %c0_i32_0 = arith.constant 0 : i32
    %c0_i32_1 = arith.constant 0 : i32
    return %c0_i32, %c0_i32_0 : i32, i32
  }
  func.func @transform_3(%arg0: i32) -> (i32, i32) {
    %c0_i32 = arith.constant 0 : i32
    %c0_i32_0 = arith.constant 0 : i32
    %c0_i32_1 = arith.constant 0 : i32
    return %c0_i32, %c0_i32_0 : i32, i32
  }
  func.func @transform_4(%arg0: i32) -> (i32, i32) {
    %c0_i32 = arith.constant 0 : i32
    %c0_i32_0 = arith.constant 0 : i32
    %c0_i32_1 = arith.constant 0 : i32
    return %c0_i32, %c0_i32_0 : i32, i32
  }
  func.func @transform_5(%arg0: i32) -> (i32, i32) {
    %c0_i32 = arith.constant 0 : i32
    %c0_i32_0 = arith.constant 0 : i32
    %c0_i32_1 = arith.constant 0 : i32
    return %c0_i32, %c0_i32_0 : i32, i32
  }
  func.func @transform_6(%arg0: i32) -> (i32, i32) {
    %c0_i32 = arith.constant 0 : i32
    %c0_i32_0 = arith.constant 0 : i32
    %c0_i32_1 = arith.constant 0 : i32
    return %c0_i32, %c0_i32_0 : i32, i32
  }
  func.func @transform_7(%arg0: i32) -> (i32, i32) {
    %c0_i32 = arith.constant 0 : i32
    %c0_i32_0 = arith.constant 0 : i32
    %c0_i32_1 = arith.constant 0 : i32
    return %c0_i32, %c0_i32_0 : i32, i32
  }
  func.func @transform_8(%arg0: i32) -> (i32, i32) {
    %c0_i32 = arith.constant 0 : i32
    %c0_i32_0 = arith.constant 0 : i32
    return %arg0, %c0_i32 : i32, i32
  }
}

</mosaic_0001>

<llo_original>
// kernel: tpu_custom_call.1
$region0: #{tpu_custom_call.1}
  #allocation0 [shape = 'u32[]', space=smem, size = 0x4, offset = 0x4, fixed_abs, tag = 'smem constant byte address 0x4 - core index']
  #allocation1 [shape = 'u32[144,128]{1,0:T(1,128)}', space=vmem, size = 0x12000, scoped, tag = 'internal scratch']
  %s0 = inlined_call_operand.vmem [shape: f32[8,16], index: 0, kind: input, shape index: {}]
  %s1 = inlined_call_operand.vmem [shape: f32[8,4], index: 1, kind: input, shape index: {}]
  %s2 = inlined_call_operand.vmem [shape: f32[16,32], index: 2, kind: input, shape index: {}]
  %s3 = inlined_call_operand.vmem [shape: f32[1,32], index: 3, kind: input, shape index: {}]
  %s4 = inlined_call_operand.vmem [shape: f32[32,32], index: 4, kind: input, shape index: {}]
  %s5 = inlined_call_operand.vmem [shape: f32[1,32], index: 5, kind: input, shape index: {}]
  %s6 = inlined_call_operand.vmem [shape: f32[32,8], index: 6, kind: input, shape index: {}]
  %s7 = inlined_call_operand.vmem [shape: f32[1,8], index: 7, kind: input, shape index: {}]
  %s8 = inlined_call_operand.hbm [shape: f32[8,16], index: 8, kind: output, shape index: {}]
  %s9 = sld [smem:[#allocation0]]
  $region42: #{tpu_custom_call.1} parent=0
    _
  %s11 = ssub.s32 1, %s9
  %s12 = scalar_select 0, %s11, %s9
  $region1: #{tpu_custom_call.1} parent=0
    #allocation2 [shape = 'u8[4096]{0}', space=vmem, size = 0x1000, scoped, tag = 'output window, operand 0, single buffered']
    #allocation3 [shape = 's32[1]{0}', space=sflag, size = 0x4, scoped, tag = 'scoped memory for tpu_custom_call.1']
    %13 = vsyncpa [#allocation3], 0
    // Predicated region
    $region2: #{tpu_custom_call.1} parent=1 // pred_check
      _
    $region3: #{tpu_custom_call.1} parent=1 // pred_check_branch
      %15 = sbr.rel (0) target = $region5
    $region4: #{tpu_custom_call.1} parent=1 // pred_region
      _
    $region5: #{tpu_custom_call.1} parent=1 // pred_fallthru
      _
    // Predicated region
    $region6: #{tpu_custom_call.1} parent=1 // pred_check
      _
    $region7: #{tpu_custom_call.1} parent=1 // pred_check_branch
      %17 = sbr.rel (0) target = $region9
    $region8: #{tpu_custom_call.1} parent=1 // pred_region
      _
    $region9: #{tpu_custom_call.1} parent=1 // pred_fallthru
      _
    // Predicated region
    $region10: #{tpu_custom_call.1} parent=1 // pred_check
      _
    $region11: #{tpu_custom_call.1} parent=1 // pred_check_branch
      %19 = sbr.rel (0) target = $region13
    $region12: #{tpu_custom_call.1} parent=1 // pred_region
      _
    $region13: #{tpu_custom_call.1} parent=1 // pred_fallthru
      _
    // Predicated region
    $region14: #{tpu_custom_call.1} parent=1 // pred_check
      _
    $region15: #{tpu_custom_call.1} parent=1 // pred_check_branch
      %21 = sbr.rel (0) target = $region17
    $region16: #{tpu_custom_call.1} parent=1 // pred_region
      _
    $region17: #{tpu_custom_call.1} parent=1 // pred_fallthru
      _
    // Predicated region
    $region18: #{tpu_custom_call.1} parent=1 // pred_check
      _
    $region19: #{tpu_custom_call.1} parent=1 // pred_check_branch
      %23 = sbr.rel (0) target = $region21
    $region20: #{tpu_custom_call.1} parent=1 // pred_region
      _
    $region21: #{tpu_custom_call.1} parent=1 // pred_fallthru
      _
    // Predicated region
    $region22: #{tpu_custom_call.1} parent=1 // pred_check
      _
    $region23: #{tpu_custom_call.1} parent=1 // pred_check_branch
      %25 = sbr.rel (0) target = $region25
    $region24: #{tpu_custom_call.1} parent=1 // pred_region
      _
    $region25: #{tpu_custom_call.1} parent=1 // pred_fallthru
      _
    // Predicated region
    $region26: #{tpu_custom_call.1} parent=1 // pred_check
      _
    $region27: #{tpu_custom_call.1} parent=1 // pred_check_branch
      %27 = sbr.rel (0) target = $region29
    $region28: #{tpu_custom_call.1} parent=1 // pred_region
      _
    $region29: #{tpu_custom_call.1} parent=1 // pred_fallthru
      _
    // Predicated region
    $region30: #{tpu_custom_call.1} parent=1 // pred_check
      _
    $region31: #{tpu_custom_call.1} parent=1 // pred_check_branch
      %29 = sbr.rel (0) target = $region33
    $region32: #{tpu_custom_call.1} parent=1 // pred_region
      _
    $region33: #{tpu_custom_call.1} parent=1 // pred_fallthru
      _
    %v30 = vld [vmem:[%s0] sm:$0xff]
    %v31 = vld [vmem:[%s2] sm:$0xff]
    %v32 = vld [vmem:[%s2 + $0x8] sm:$0xff]
    %v33 = vld [vmem:[%s3] sm:$0x1]
    %v35 = vlaneseq
    %v36 = vshrl.u32 %v35, 7
    %v37 = vsub.s32 0, %v36
    %v38 = vrot.slane %v33, %v37
    %vm40 = vcmask 130048
    %v42 = vsel %vm40, %v30, 0
    %44 = vmatprep.subr.mxu0 0.0
    %45 = vmatpush1.msra.mxu0 %v31
    %46 = vmatprep.subr.mxu0 0.0
    %47 = vmatpush1.msra.mxu0 %v32
    %48 = vmatprep.subr.mxu0 0.0
    %49 = vmatpush1.msra.mxu0 0.0
    %50 = vmatprep.subr.mxu0 0.0
    %51 = vmatpush1.msra.mxu0 0.0
    %52 = vmatprep.subr.mxu0 0.0
    %53 = vmatpush1.msra.mxu0 0.0
    %54 = vmatprep.subr.mxu0 0.0
    %55 = vmatpush1.msra.mxu0 0.0
    %56 = vmatprep.subr.mxu0 0.0
    %57 = vmatpush1.msra.mxu0 0.0
    %58 = vmatprep.subr.mxu0 0.0
    %59 = vmatpush1.msra.mxu0 0.0
    %60 = vmatprep.subr.mxu0 0.0
    %61 = vmatpush1.msra.mxu0 0.0
    %62 = vmatprep.subr.mxu0 0.0
    %63 = vmatpush1.msra.mxu0 0.0
    %64 = vmatprep.subr.mxu0 0.0
    %65 = vmatpush1.msra.mxu0 0.0
    %66 = vmatprep.subr.mxu0 0.0
    %67 = vmatpush1.msra.mxu0 0.0
    %68 = vmatprep.subr.mxu0 0.0
    %69 = vmatpush1.msra.mxu0 0.0
    %70 = vmatprep.subr.mxu0 0.0
    %71 = vmatpush1.msra.mxu0 0.0
    %72 = vmatprep.subr.mxu0 0.0
    %73 = vmatpush1.msra.mxu0 0.0
    %74 = vmatprep.subr.mxu0 0.0
    %75 = vmatpush1.msra.mxu0 0.0
    %76 = vmatprep.subr.mxu0 0.0
    %77 = vmatpush1.msra.mxu0 0.0
    %78 = vmatprep.subr.mxu0 0.0
    %79 = vmatpush1.msra.mxu0 0.0
    %80 = vmatprep.subr.mxu0 0.0
    %81 = vmatpush1.msra.mxu0 0.0
    %82 = vmatprep.subr.mxu0 0.0
    %83 = vmatpush1.msra.mxu0 0.0
    %84 = vmatprep.subr.mxu0 0.0
    %85 = vmatpush1.msra.mxu0 0.0
    %86 = vmatprep.subr.mxu0 0.0
    %87 = vmatpush1.msra.mxu0 0.0
    %88 = vmatprep.subr.mxu0 0.0
    %89 = vmatpush1.msra.mxu0 0.0
    %90 = vmatprep.subr.mxu0 0.0
    %91 = vmatpush1.msra.mxu0 0.0
    %92 = vmatprep.subr.mxu0 0.0
    %93 = vmatpush1.msra.mxu0 0.0
    %94 = vmatprep.subr.mxu0 0.0
    %95 = vmatpush1.msra.mxu0 0.0
    %96 = vmatprep.subr.mxu0 0.0
    %97 = vmatpush1.msra.mxu0 0.0
    %98 = vmatprep.subr.mxu0 0.0
    %99 = vmatpush1.msra.mxu0 0.0
    %100 = vmatprep.subr.mxu0 0.0
    %101 = vmatpush1.msra.mxu0 0.0
    %102 = vmatprep.subr.mxu0 0.0
    %103 = vmatpush1.msra.mxu0 0.0
    %104 = vmatprep.subr.mxu0 0.0
    %105 = vmatpush1.msra.mxu0 0.0
    %106 = vmatprep.subr.mxu0 0.0
    %107 = vmatpush1.msra.mxu0 0.0
    %108 = vmatprep.mubr.f32.mxu0 0.0
    %109 = vmatmul.mubr.f32.gmra.mrb[0].mxu0 %v42
    %v110 = vpop.f32.mrb[0].mxu0
    %v111 = vadd.f32 %v38, %v110
    %v112 = vpop.f32.mrb[0].mxu0
    %113 = vdwg.mxu0
    %v114 = vmax.f32 %v111, 0.0
    %v115 = vld [vmem:[%s4] sm:$0xff]
    %v116 = vld [vmem:[%s4 + $0x8] sm:$0xff]
    %v117 = vld [vmem:[%s4 + $0x10] sm:$0xff]
    %v118 = vld [vmem:[%s4 + $0x18] sm:$0xff]
    %v119 = vld [vmem:[%s5] sm:$0x1]
    %v121 = vlaneseq
    %v122 = vshrl.u32 %v121, 7
    %v123 = vsub.s32 0, %v122
    %v124 = vrot.slane %v119, %v123
    %vm126 = vcmask 261120
    %v128 = vsel %vm126, %v114, 0
    %130 = vmatprep.subr.mxu0 0.0
    %131 = vmatpush1.msra.mxu0 %v115
    %132 = vmatprep.subr.mxu0 0.0
    %133 = vmatpush1.msra.mxu0 %v116
    %134 = vmatprep.subr.mxu0 0.0
    %135 = vmatpush1.msra.mxu0 %v117
    %136 = vmatprep.subr.mxu0 0.0
    %137 = vmatpush1.msra.mxu0 %v118
    %138 = vmatprep.subr.mxu0 0.0
    %139 = vmatpush1.msra.mxu0 0.0
    %140 = vmatprep.subr.mxu0 0.0
    %141 = vmatpush1.msra.mxu0 0.0
    %142 = vmatprep.subr.mxu0 0.0
    %143 = vmatpush1.msra.mxu0 0.0
    %144 = vmatprep.subr.mxu0 0.0
    %145 = vmatpush1.msra.mxu0 0.0
    %146 = vmatprep.subr.mxu0 0.0
    %147 = vmatpush1.msra.mxu0 0.0
    %148 = vmatprep.subr.mxu0 0.0
    %149 = vmatpush1.msra.mxu0 0.0
    %150 = vmatprep.subr.mxu0 0.0
    %151 = vmatpush1.msra.mxu0 0.0
    %152 = vmatprep.subr.mxu0 0.0
    %153 = vmatpush1.msra.mxu0 0.0
    %154 = vmatprep.subr.mxu0 0.0
    %155 = vmatpush1.msra.mxu0 0.0
    %156 = vmatprep.subr.mxu0 0.0
    %157 = vmatpush1.msra.mxu0 0.0
    %158 = vmatprep.subr.mxu0 0.0
    %159 = vmatpush1.msra.mxu0 0.0
    %160 = vmatprep.subr.mxu0 0.0
    %161 = vmatpush1.msra.mxu0 0.0
    %162 = vmatprep.subr.mxu0 0.0
    %163 = vmatpush1.msra.mxu0 0.0
    %164 = vmatprep.subr.mxu0 0.0
    %165 = vmatpush1.msra.mxu0 0.0
    %166 = vmatprep.subr.mxu0 0.0
    %167 = vmatpush1.msra.mxu0 0.0
    %168 = vmatprep.subr.mxu0 0.0
    %169 = vmatpush1.msra.mxu0 0.0
    %170 = vmatprep.subr.mxu0 0.0
    %171 = vmatpush1.msra.mxu0 0.0
    %172 = vmatprep.subr.mxu0 0.0
    %173 = vmatpush1.msra.mxu0 0.0
    %174 = vmatprep.subr.mxu0 0.0
    %175 = vmatpush1.msra.mxu0 0.0
    %176 = vmatprep.subr.mxu0 0.0
    %177 = vmatpush1.msra.mxu0 0.0
    %178 = vmatprep.subr.mxu0 0.0
    %179 = vmatpush1.msra.mxu0 0.0
    %180 = vmatprep.subr.mxu0 0.0
    %181 = vmatpush1.msra.mxu0 0.0
    %182 = vmatprep.subr.mxu0 0.0
    %183 = vmatpush1.msra.mxu0 0.0
    %184 = vmatprep.subr.mxu0 0.0
    %185 = vmatpush1.msra.mxu0 0.0
    %186 = vmatprep.subr.mxu0 0.0
    %187 = vmatpush1.msra.mxu0 0.0
    %188 = vmatprep.subr.mxu0 0.0
    %189 = vmatpush1.msra.mxu0 0.0
    %190 = vmatprep.subr.mxu0 0.0
    %191 = vmatpush1.msra.mxu0 0.0
    %192 = vmatprep.subr.mxu0 0.0
    %193 = vmatpush1.msra.mxu0 0.0
    %194 = vmatprep.mubr.f32.mxu0 0.0
    %195 = vmatmul.mubr.f32.gmra.mrb[0].mxu0 %v128
    %v196 = vpop.f32.mrb[0].mxu0
    %v197 = vadd.f32 %v124, %v196
    %v198 = vpop.f32.mrb[0].mxu0
    %199 = vdwg.mxu0
    %v200 = vmax.f32 %v197, 0.0
    %v201 = vld [vmem:[%s6] sm:$0xff]
    %v202 = vld [vmem:[%s6 + $0x8] sm:$0xff]
    %v203 = vld [vmem:[%s6 + $0x10] sm:$0xff]
    %v204 = vld [vmem:[%s6 + $0x18] sm:$0xff]
    %v205 = vld [vmem:[%s7] sm:$0x1]
    %v207 = vlaneseq
    %v208 = vshrl.u32 %v207, 7
    %v209 = vsub.s32 0, %v208
    %v210 = vrot.slane %v205, %v209
    %v213 = vsel %vm126, %v200, 0
    %215 = vmatprep.subr.mxu0 0.0
    %216 = vmatpush1.msra.mxu0 %v201
    %217 = vmatprep.subr.mxu0 0.0
    %218 = vmatpush1.msra.mxu0 %v202
    %219 = vmatprep.subr.mxu0 0.0
    %220 = vmatpush1.msra.mxu0 %v203
    %221 = vmatprep.subr.mxu0 0.0
    %222 = vmatpush1.msra.mxu0 %v204
    %223 = vmatprep.subr.mxu0 0.0
    %224 = vmatpush1.msra.mxu0 0.0
    %225 = vmatprep.subr.mxu0 0.0
    %226 = vmatpush1.msra.mxu0 0.0
    %227 = vmatprep.subr.mxu0 0.0
    %228 = vmatpush1.msra.mxu0 0.0
    %229 = vmatprep.subr.mxu0 0.0
    %230 = vmatpush1.msra.mxu0 0.0
    %231 = vmatprep.subr.mxu0 0.0
    %232 = vmatpush1.msra.mxu0 0.0
    %233 = vmatprep.subr.mxu0 0.0
    %234 = vmatpush1.msra.mxu0 0.0
    %235 = vmatprep.subr.mxu0 0.0
    %236 = vmatpush1.msra.mxu0 0.0
    %237 = vmatprep.subr.mxu0 0.0
    %238 = vmatpush1.msra.mxu0 0.0
    %239 = vmatprep.subr.mxu0 0.0
    %240 = vmatpush1.msra.mxu0 0.0
    %241 = vmatprep.subr.mxu0 0.0
    %242 = vmatpush1.msra.mxu0 0.0
    %243 = vmatprep.subr.mxu0 0.0
    %244 = vmatpush1.msra.mxu0 0.0
    %245 = vmatprep.subr.mxu0 0.0
    %246 = vmatpush1.msra.mxu0 0.0
    %247 = vmatprep.subr.mxu0 0.0
    %248 = vmatpush1.msra.mxu0 0.0
    %249 = vmatprep.subr.mxu0 0.0
    %250 = vmatpush1.msra.mxu0 0.0
    %251 = vmatprep.subr.mxu0 0.0
    %252 = vmatpush1.msra.mxu0 0.0
    %253 = vmatprep.subr.mxu0 0.0
    %254 = vmatpush1.msra.mxu0 0.0
    %255 = vmatprep.subr.mxu0 0.0
    %256 = vmatpush1.msra.mxu0 0.0
    %257 = vmatprep.subr.mxu0 0.0
    %258 = vmatpush1.msra.mxu0 0.0
    %259 = vmatprep.subr.mxu0 0.0
    %260 = vmatpush1.msra.mxu0 0.0
    %261 = vmatprep.subr.mxu0 0.0
    %262 = vmatpush1.msra.mxu0 0.0
    %263 = vmatprep.subr.mxu0 0.0
    %264 = vmatpush1.msra.mxu0 0.0
    %265 = vmatprep.subr.mxu0 0.0
    %266 = vmatpush1.msra.mxu0 0.0
    %267 = vmatprep.subr.mxu0 0.0
    %268 = vmatpush1.msra.mxu0 0.0
    %269 = vmatprep.subr.mxu0 0.0
    %270 = vmatpush1.msra.mxu0 0.0
    %271 = vmatprep.subr.mxu0 0.0
    %272 = vmatpush1.msra.mxu0 0.0
    %273 = vmatprep.subr.mxu0 0.0
    %274 = vmatpush1.msra.mxu0 0.0
    %275 = vmatprep.subr.mxu0 0.0
    %276 = vmatpush1.msra.mxu0 0.0
    %277 = vmatprep.subr.mxu0 0.0
    %278 = vmatpush1.msra.mxu0 0.0
    %279 = vmatprep.mubr.f32.mxu0 0.0
    %280 = vmatmul.mubr.f32.gmra.mrb[0].mxu0 %v213
    %v281 = vpop.f32.mrb[0].mxu0
    %v282 = vadd.f32 %v210, %v281
    %v283 = vpop.f32.mrb[0].mxu0
    %284 = vdwg.mxu0
    %v285 = vmax.f32 %v282, -20.0
    %v286 = vmin.f32 %v285, 2.0
    %v287 = vmul.f32 %v286, 1.442695
    %v288 = vpow.pop %v287
    %v289 = vld [vmem:[%s1] sm:$0xff]
    %291 = vrot.lane.b32.xlu0 %v289, 4
    %v292 = vpop.permute.xlu0 %291
    %v294 = vmul.f32 %v288, %v292
    %296 = vrot.lane.b32.xlu0 %v294, 124
    %v297 = vpop.permute.xlu0 %296
    %v299 = vadd.f32 %v282, %v297
    %v300 = vtanh.pop %v299
    %302 = vrot.lane.b32.xlu0 %v282, 4
    %v303 = vpop.permute.xlu0 %302
    %306 = vrot.lane.b32.xlu0 %v286, 4
    %v307 = vpop.permute.xlu0 %306
    %310 = vrot.lane.b32.xlu0 %v288, 8
    %v311 = vpop.permute.xlu0 %310
    %vm313 = vcmask 31744
    %v314 = vsel %vm313, %v300, %v303
    %vm315 = vcmask 64512
    %v316 = vsel %vm315, %v314, %v307
    %vm317 = vcmask 97280
    %v318 = vsel %vm317, %v316, %v311
    %319 = vst.msk [vmem:[#allocation2] sm:$0xff] %vm40, %v318
    // Predicated region
    $region34: #{tpu_custom_call.1} parent=1 // pred_check
      _
    $region35: #{tpu_custom_call.1} parent=1 // pred_check_branch
      %321 = sbr.rel (0) target = $region37
    $region36: #{tpu_custom_call.1} parent=1 // pred_region
      %s323 = ssub.s32 128, 128
      %324 = vsyncadd [#allocation3], %s323
      %s326 = sshll.u32 [#allocation2], 4
      %s327 = int_to_ptr.vmem [resolvable:$true] %s326
      %329 = dma.vmem_to_hbm [thread:$0]  %s327, 128, %s8, [#allocation3]
    $region37: #{tpu_custom_call.1} parent=1 // pred_fallthru
      _
    // Predicated region
    $region38: #{tpu_custom_call.1} parent=1 // pred_check
      _
    $region39: #{tpu_custom_call.1} parent=1 // pred_check_branch
      %331 = sbr.rel (0) target = $region41
    $region40: #{tpu_custom_call.1} parent=1 // pred_region
      %332 = dma.done [#allocation3], 128
    $region41: #{tpu_custom_call.1} parent=1 // pred_fallthru
      _
    %333 = vsyncpa [#allocation3], 1

// kernel: tpu_custom_call.1
$region0: #{tpu_custom_call.1}
  #allocation0 [shape = 'u32[]', space=smem, size = 0x4, offset = 0x4, fixed_abs, tag = 'smem constant byte address 0x4 - core index']
  #allocation1 [shape = 'u32[144,128]{1,0:T(1,128)}', space=vmem, size = 0x12000, scoped, tag = 'internal scratch']
  %s0 = inlined_call_operand.vmem [shape: f32[8,16], index: 0, kind: input, shape index: {}]
  %s1 = inlined_call_operand.vmem [shape: f32[8,4], index: 1, kind: input, shape index: {}]
  %s2 = inlined_call_operand.vmem [shape: f32[16,32], index: 2, kind: input, shape index: {}]
  %s3 = inlined_call_operand.vmem [shape: f32[1,32], index: 3, kind: input, shape index: {}]
  %s4 = inlined_call_operand.vmem [shape: f32[32,32], index: 4, kind: input, shape index: {}]
  %s5 = inlined_call_operand.vmem [shape: f32[1,32], index: 5, kind: input, shape index: {}]
  %s6 = inlined_call_operand.vmem [shape: f32[32,8], index: 6, kind: input, shape index: {}]
  %s7 = inlined_call_operand.vmem [shape: f32[1,8], index: 7, kind: input, shape index: {}]
  %s8 = inlined_call_operand.hbm [shape: f32[8,16], index: 8, kind: output, shape index: {}]
  %s9 = sld [smem:[#allocation0]]
  $region42: #{tpu_custom_call.1} parent=0
    _
  %s11 = ssub.s32 1, %s9
  %s12 = scalar_select 0, %s11, %s9
  $region1: #{tpu_custom_call.1} parent=0
    #allocation2 [shape = 'u8[4096]{0}', space=vmem, size = 0x1000, scoped, tag = 'output window, operand 0, single buffered']
    #allocation3 [shape = 's32[1]{0}', space=sflag, size = 0x4, scoped, tag = 'scoped memory for tpu_custom_call.1']
    %13 = vsyncpa [#allocation3], 0
    // Predicated region
    $region2: #{tpu_custom_call.1} parent=1 // pred_check
      _
    $region3: #{tpu_custom_call.1} parent=1 // pred_check_branch
      %15 = sbr.rel (0) target = $region5
    $region4: #{tpu_custom_call.1} parent=1 // pred_region
      _
    $region5: #{tpu_custom_call.1} parent=1 // pred_fallthru
      _
    // Predicated region
    $region6: #{tpu_custom_call.1} parent=1 // pred_check
      _
    $region7: #{tpu_custom_call.1} parent=1 // pred_check_branch
      %17 = sbr.rel (0) target = $region9
    $region8: #{tpu_custom_call.1} parent=1 // pred_region
      _
    $region9: #{tpu_custom_call.1} parent=1 // pred_fallthru
      _
    // Predicated region
    $region10: #{tpu_custom_call.1} parent=1 // pred_check
      _
    $region11: #{tpu_custom_call.1} parent=1 // pred_check_branch
      %19 = sbr.rel (0) target = $region13
    $region12: #{tpu_custom_call.1} parent=1 // pred_region
      _
    $region13: #{tpu_custom_call.1} parent=1 // pred_fallthru
      _
    // Predicated region
    $region14: #{tpu_custom_call.1} parent=1 // pred_check
      _
    $region15: #{tpu_custom_call.1} parent=1 // pred_check_branch
      %21 = sbr.rel (0) target = $region17
    $region16: #{tpu_custom_call.1} parent=1 // pred_region
      _
    $region17: #{tpu_custom_call.1} parent=1 // pred_fallthru
      _
    // Predicated region
    $region18: #{tpu_custom_call.1} parent=1 // pred_check
      _
    $region19: #{tpu_custom_call.1} parent=1 // pred_check_branch
      %23 = sbr.rel (0) target = $region21
    $region20: #{tpu_custom_call.1} parent=1 // pred_region
      _
    $region21: #{tpu_custom_call.1} parent=1 // pred_fallthru
      _
    // Predicated region
    $region22: #{tpu_custom_call.1} parent=1 // pred_check
      _
    $region23: #{tpu_custom_call.1} parent=1 // pred_check_branch
      %25 = sbr.rel (0) target = $region25
    $region24: #{tpu_custom_call.1} parent=1 // pred_region
      _
    $region25: #{tpu_custom_call.1} parent=1 // pred_fallthru
      _
    // Predicated region
    $region26: #{tpu_custom_call.1} parent=1 // pred_check
      _
    $region27: #{tpu_custom_call.1} parent=1 // pred_check_branch
      %27 = sbr.rel (0) target = $region29
    $region28: #{tpu_custom_call.1} parent=1 // pred_region
      _
    $region29: #{tpu_custom_call.1} parent=1 // pred_fallthru
      _
    // Predicated region
    $region30: #{tpu_custom_call.1} parent=1 // pred_check
      _
    $region31: #{tpu_custom_call.1} parent=1 // pred_check_branch
      %29 = sbr.rel (0) target = $region33
    $region32: #{tpu_custom_call.1} parent=1 // pred_region
      _
    $region33: #{tpu_custom_call.1} parent=1 // pred_fallthru
      _
    %v30 = vld [vmem:[%s0] sm:$0xff]
    %v31 = vld [vmem:[%s2] sm:$0xff]
    %v32 = vld [vmem:[%s2 + $0x8] sm:$0xff]
    %v33 = vld [vmem:[%s3] sm:$0x1]
    %v35 = vlaneseq
    %v36 = vshrl.u32 %v35, 7
    %v37 = vsub.s32 0, %v36
    %v38 = vrot.slane %v33, %v37
    %vm40 = vcmask 130048
    %v42 = vsel %vm40, %v30, 0
    %44 = vmatprep.subr.mxu0 0.0
    %45 = vmatpush1.msra.mxu0 %v31
    %46 = vmatprep.subr.mxu0 0.0
    %47 = vmatpush1.msra.mxu0 %v32
    %48 = vmatprep.subr.mxu0 0.0
    %49 = vmatpush1.msra.mxu0 0.0
    %50 = vmatprep.subr.mxu0 0.0
    %51 = vmatpush1.msra.mxu0 0.0
    %52 = vmatprep.subr.mxu0 0.0
    %53 = vmatpush1.msra.mxu0 0.0
    %54 = vmatprep.subr.mxu0 0.0
    %55 = vmatpush1.msra.mxu0 0.0
    %56 = vmatprep.subr.mxu0 0.0
    %57 = vmatpush1.msra.mxu0 0.0
    %58 = vmatprep.subr.mxu0 0.0
    %59 = vmatpush1.msra.mxu0 0.0
    %60 = vmatprep.subr.mxu0 0.0
    %61 = vmatpush1.msra.mxu0 0.0
    %62 = vmatprep.subr.mxu0 0.0
    %63 = vmatpush1.msra.mxu0 0.0
    %64 = vmatprep.subr.mxu0 0.0
    %65 = vmatpush1.msra.mxu0 0.0
    %66 = vmatprep.subr.mxu0 0.0
    %67 = vmatpush1.msra.mxu0 0.0
    %68 = vmatprep.subr.mxu0 0.0
    %69 = vmatpush1.msra.mxu0 0.0
    %70 = vmatprep.subr.mxu0 0.0
    %71 = vmatpush1.msra.mxu0 0.0
    %72 = vmatprep.subr.mxu0 0.0
    %73 = vmatpush1.msra.mxu0 0.0
    %74 = vmatprep.subr.mxu0 0.0
    %75 = vmatpush1.msra.mxu0 0.0
    %76 = vmatprep.subr.mxu0 0.0
    %77 = vmatpush1.msra.mxu0 0.0
    %78 = vmatprep.subr.mxu0 0.0
    %79 = vmatpush1.msra.mxu0 0.0
    %80 = vmatprep.subr.mxu0 0.0
    %81 = vmatpush1.msra.mxu0 0.0
    %82 = vmatprep.subr.mxu0 0.0
    %83 = vmatpush1.msra.mxu0 0.0
    %84 = vmatprep.subr.mxu0 0.0
    %85 = vmatpush1.msra.mxu0 0.0
    %86 = vmatprep.subr.mxu0 0.0
    %87 = vmatpush1.msra.mxu0 0.0
    %88 = vmatprep.subr.mxu0 0.0
    %89 = vmatpush1.msra.mxu0 0.0
    %90 = vmatprep.subr.mxu0 0.0
    %91 = vmatpush1.msra.mxu0 0.0
    %92 = vmatprep.subr.mxu0 0.0
    %93 = vmatpush1.msra.mxu0 0.0
    %94 = vmatprep.subr.mxu0 0.0
    %95 = vmatpush1.msra.mxu0 0.0
    %96 = vmatprep.subr.mxu0 0.0
    %97 = vmatpush1.msra.mxu0 0.0
    %98 = vmatprep.subr.mxu0 0.0
    %99 = vmatpush1.msra.mxu0 0.0
    %100 = vmatprep.subr.mxu0 0.0
    %101 = vmatpush1.msra.mxu0 0.0
    %102 = vmatprep.subr.mxu0 0.0
    %103 = vmatpush1.msra.mxu0 0.0
    %104 = vmatprep.subr.mxu0 0.0
    %105 = vmatpush1.msra.mxu0 0.0
    %106 = vmatprep.subr.mxu0 0.0
    %107 = vmatpush1.msra.mxu0 0.0
    %108 = vmatprep.mubr.f32.mxu0 0.0
    %109 = vmatmul.mubr.f32.gmra.mrb[0].mxu0 %v42
    %v110 = vpop.f32.mrb[0].mxu0
    %v111 = vadd.f32 %v38, %v110
    %v112 = vpop.f32.mrb[0].mxu0
    %113 = vdwg.mxu0
    %v114 = vmax.f32 %v111, 0.0
    %v115 = vld [vmem:[%s4] sm:$0xff]
    %v116 = vld [vmem:[%s4 + $0x8] sm:$0xff]
    %v117 = vld [vmem:[%s4 + $0x10] sm:$0xff]
    %v118 = vld [vmem:[%s4 + $0x18] sm:$0xff]
    %v119 = vld [vmem:[%s5] sm:$0x1]
    %v121 = vlaneseq
    %v122 = vshrl.u32 %v121, 7
    %v123 = vsub.s32 0, %v122
    %v124 = vrot.slane %v119, %v123
    %vm126 = vcmask 261120
    %v128 = vsel %vm126, %v114, 0
    %130 = vmatprep.subr.mxu0 0.0
    %131 = vmatpush1.msra.mxu0 %v115
    %132 = vmatprep.subr.mxu0 0.0
    %133 = vmatpush1.msra.mxu0 %v116
    %134 = vmatprep.subr.mxu0 0.0
    %135 = vmatpush1.msra.mxu0 %v117
    %136 = vmatprep.subr.mxu0 0.0
    %137 = vmatpush1.msra.mxu0 %v118
    %138 = vmatprep.subr.mxu0 0.0
    %139 = vmatpush1.msra.mxu0 0.0
    %140 = vmatprep.subr.mxu0 0.0
    %141 = vmatpush1.msra.mxu0 0.0
    %142 = vmatprep.subr.mxu0 0.0
    %143 = vmatpush1.msra.mxu0 0.0
    %144 = vmatprep.subr.mxu0 0.0
    %145 = vmatpush1.msra.mxu0 0.0
    %146 = vmatprep.subr.mxu0 0.0
    %147 = vmatpush1.msra.mxu0 0.0
    %148 = vmatprep.subr.mxu0 0.0
    %149 = vmatpush1.msra.mxu0 0.0
    %150 = vmatprep.subr.mxu0 0.0
    %151 = vmatpush1.msra.mxu0 0.0
    %152 = vmatprep.subr.mxu0 0.0
    %153 = vmatpush1.msra.mxu0 0.0
    %154 = vmatprep.subr.mxu0 0.0
    %155 = vmatpush1.msra.mxu0 0.0
    %156 = vmatprep.subr.mxu0 0.0
    %157 = vmatpush1.msra.mxu0 0.0
    %158 = vmatprep.subr.mxu0 0.0
    %159 = vmatpush1.msra.mxu0 0.0
    %160 = vmatprep.subr.mxu0 0.0
    %161 = vmatpush1.msra.mxu0 0.0
    %162 = vmatprep.subr.mxu0 0.0
    %163 = vmatpush1.msra.mxu0 0.0
    %164 = vmatprep.subr.mxu0 0.0
    %165 = vmatpush1.msra.mxu0 0.0
    %166 = vmatprep.subr.mxu0 0.0
    %167 = vmatpush1.msra.mxu0 0.0
    %168 = vmatprep.subr.mxu0 0.0
    %169 = vmatpush1.msra.mxu0 0.0
    %170 = vmatprep.subr.mxu0 0.0
    %171 = vmatpush1.msra.mxu0 0.0
    %172 = vmatprep.subr.mxu0 0.0
    %173 = vmatpush1.msra.mxu0 0.0
    %174 = vmatprep.subr.mxu0 0.0
    %175 = vmatpush1.msra.mxu0 0.0
    %176 = vmatprep.subr.mxu0 0.0
    %177 = vmatpush1.msra.mxu0 0.0
    %178 = vmatprep.subr.mxu0 0.0
    %179 = vmatpush1.msra.mxu0 0.0
    %180 = vmatprep.subr.mxu0 0.0
    %181 = vmatpush1.msra.mxu0 0.0
    %182 = vmatprep.subr.mxu0 0.0
    %183 = vmatpush1.msra.mxu0 0.0
    %184 = vmatprep.subr.mxu0 0.0
    %185 = vmatpush1.msra.mxu0 0.0
    %186 = vmatprep.subr.mxu0 0.0
    %187 = vmatpush1.msra.mxu0 0.0
    %188 = vmatprep.subr.mxu0 0.0
    %189 = vmatpush1.msra.mxu0 0.0
    %190 = vmatprep.subr.mxu0 0.0
    %191 = vmatpush1.msra.mxu0 0.0
    %192 = vmatprep.subr.mxu0 0.0
    %193 = vmatpush1.msra.mxu0 0.0
    %194 = vmatprep.mubr.f32.mxu0 0.0
    %195 = vmatmul.mubr.f32.gmra.mrb[0].mxu0 %v128
    %v196 = vpop.f32.mrb[0].mxu0
    %v197 = vadd.f32 %v124, %v196
    %v198 = vpop.f32.mrb[0].mxu0
    %199 = vdwg.mxu0
    %v200 = vmax.f32 %v197, 0.0
    %v201 = vld [vmem:[%s6] sm:$0xff]
    %v202 = vld [vmem:[%s6 + $0x8] sm:$0xff]
    %v203 = vld [vmem:[%s6 + $0x10] sm:$0xff]
    %v204 = vld [vmem:[%s6 + $0x18] sm:$0xff]
    %v205 = vld [vmem:[%s7] sm:$0x1]
    %v207 = vlaneseq
    %v208 = vshrl.u32 %v207, 7
    %v209 = vsub.s32 0, %v208
    %v210 = vrot.slane %v205, %v209
    %v213 = vsel %vm126, %v200, 0
    %215 = vmatprep.subr.mxu0 0.0
    %216 = vmatpush1.msra.mxu0 %v201
    %217 = vmatprep.subr.mxu0 0.0
    %218 = vmatpush1.msra.mxu0 %v202
    %219 = vmatprep.subr.mxu0 0.0
    %220 = vmatpush1.msra.mxu0 %v203
    %221 = vmatprep.subr.mxu0 0.0
    %222 = vmatpush1.msra.mxu0 %v204
    %223 = vmatprep.subr.mxu0 0.0
    %224 = vmatpush1.msra.mxu0 0.0
    %225 = vmatprep.subr.mxu0 0.0
    %226 = vmatpush1.msra.mxu0 0.0
    %227 = vmatprep.subr.mxu0 0.0
    %228 = vmatpush1.msra.mxu0 0.0
    %229 = vmatprep.subr.mxu0 0.0
    %230 = vmatpush1.msra.mxu0 0.0
    %231 = vmatprep.subr.mxu0 0.0
    %232 = vmatpush1.msra.mxu0 0.0
    %233 = vmatprep.subr.mxu0 0.0
    %234 = vmatpush1.msra.mxu0 0.0
    %235 = vmatprep.subr.mxu0 0.0
    %236 = vmatpush1.msra.mxu0 0.0
    %237 = vmatprep.subr.mxu0 0.0
    %238 = vmatpush1.msra.mxu0 0.0
    %239 = vmatprep.subr.mxu0 0.0
    %240 = vmatpush1.msra.mxu0 0.0
    %241 = vmatprep.subr.mxu0 0.0
    %242 = vmatpush1.msra.mxu0 0.0
    %243 = vmatprep.subr.mxu0 0.0
    %244 = vmatpush1.msra.mxu0 0.0
    %245 = vmatprep.subr.mxu0 0.0
    %246 = vmatpush1.msra.mxu0 0.0
    %247 = vmatprep.subr.mxu0 0.0
    %248 = vmatpush1.msra.mxu0 0.0
    %249 = vmatprep.subr.mxu0 0.0
    %250 = vmatpush1.msra.mxu0 0.0
    %251 = vmatprep.subr.mxu0 0.0
    %252 = vmatpush1.msra.mxu0 0.0
    %253 = vmatprep.subr.mxu0 0.0
    %254 = vmatpush1.msra.mxu0 0.0
    %255 = vmatprep.subr.mxu0 0.0
    %256 = vmatpush1.msra.mxu0 0.0
    %257 = vmatprep.subr.mxu0 0.0
    %258 = vmatpush1.msra.mxu0 0.0
    %259 = vmatprep.subr.mxu0 0.0
    %260 = vmatpush1.msra.mxu0 0.0
    %261 = vmatprep.subr.mxu0 0.0
    %262 = vmatpush1.msra.mxu0 0.0
    %263 = vmatprep.subr.mxu0 0.0
    %264 = vmatpush1.msra.mxu0 0.0
    %265 = vmatprep.subr.mxu0 0.0
    %266 = vmatpush1.msra.mxu0 0.0
    %267 = vmatprep.subr.mxu0 0.0
    %268 = vmatpush1.msra.mxu0 0.0
    %269 = vmatprep.subr.mxu0 0.0
    %270 = vmatpush1.msra.mxu0 0.0
    %271 = vmatprep.subr.mxu0 0.0
    %272 = vmatpush1.msra.mxu0 0.0
    %273 = vmatprep.subr.mxu0 0.0
    %274 = vmatpush1.msra.mxu0 0.0
    %275 = vmatprep.subr.mxu0 0.0
    %276 = vmatpush1.msra.mxu0 0.0
    %277 = vmatprep.subr.mxu0 0.0
    %278 = vmatpush1.msra.mxu0 0.0
    %279 = vmatprep.mubr.f32.mxu0 0.0
    %280 = vmatmul.mubr.f32.gmra.mrb[0].mxu0 %v213
    %v281 = vpop.f32.mrb[0].mxu0
    %v282 = vadd.f32 %v210, %v281
    %v283 = vpop.f32.mrb[0].mxu0
    %284 = vdwg.mxu0
    %v285 = vmax.f32 %v282, -20.0
    %v286 = vmin.f32 %v285, 2.0
    %v287 = vmul.f32 %v286, 1.442695
    %v288 = vpow.pop %v287
    %v289 = vld [vmem:[%s1] sm:$0xff]
    %291 = vrot.lane.b32.xlu0 %v289, 4
    %v292 = vpop.permute.xlu0 %291
    %v294 = vmul.f32 %v288, %v292
    %296 = vrot.lane.b32.xlu0 %v294, 124
    %v297 = vpop.permute.xlu0 %296
    %v299 = vadd.f32 %v282, %v297
    %v300 = vtanh.pop %v299
    %302 = vrot.lane.b32.xlu0 %v282, 4
    %v303 = vpop.permute.xlu0 %302
    %306 = vrot.lane.b32.xlu0 %v286, 4
    %v307 = vpop.permute.xlu0 %306
    %310 = vrot.lane.b32.xlu0 %v288, 8
    %v311 = vpop.permute.xlu0 %310
    %vm313 = vcmask 31744
    %v314 = vsel %vm313, %v300, %v303
    %vm315 = vcmask 64512
    %v316 = vsel %vm315, %v314, %v307
    %vm317 = vcmask 97280
    %v318 = vsel %vm317, %v316, %v311
    %319 = vst.msk [vmem:[#allocation2] sm:$0xff] %vm40, %v318
    // Predicated region
    $region34: #{tpu_custom_call.1} parent=1 // pred_check
      _
    $region35: #{tpu_custom_call.1} parent=1 // pred_check_branch
      %321 = sbr.rel (0) target = $region37
    $region36: #{tpu_custom_call.1} parent=1 // pred_region
      %s323 = ssub.s32 128, 128
      %324 = vsyncadd [#allocation3], %s323
      %s326 = sshll.u32 [#allocation2], 4
      %s327 = int_to_ptr.vmem [resolvable:$true] %s326
      %329 = dma.vmem_to_hbm [thread:$0]  %s327, 128, %s8, [#allocation3]
    $region37: #{tpu_custom_call.1} parent=1 // pred_fallthru
      _
    // Predicated region
    $region38: #{tpu_custom_call.1} parent=1 // pred_check
      _
    $region39: #{tpu_custom_call.1} parent=1 // pred_check_branch
      %331 = sbr.rel (0) target = $region41
    $region40: #{tpu_custom_call.1} parent=1 // pred_region
      %332 = dma.done [#allocation3], 128
    $region41: #{tpu_custom_call.1} parent=1 // pred_fallthru
      _
    %333 = vsyncpa [#allocation3], 1

</llo_original>
